<compile_context>
chip_gen: v7x
topology: tpu7x:2x2x1
jax: 0.10.0
libtpu: 0.0.40
codegen_flags: <defaults>
</compile_context>

<pallas_src>
import functools

import jax
import jax.numpy as jnp
from jax.experimental import pallas as pl
from jax.experimental.pallas import tpu as pltpu


LANES = 128
ROWS_PER_TILE_MAX = 2048  # 2048 * 128 * 4 B = 1 MiB of f32 x per grid step


def _round_up(x, m):
    return ((x + m - 1) // m) * m


def mlp_kernel(params_ref, x_ref, o_ref, *, hdim):
    """
    params_ref : SMEM f32[3*hdim + 1]  packed as [w1 | b1 | w2 | b2]
    x_ref      : VMEM f32[TR, 128]     batch laid out as (rows, lanes)
    o_ref      : VMEM f32[TR, 128]
    """
    x = x_ref[...]                               # (TR, 128)
    acc = jnp.zeros_like(x)
    # Statically unrolled hidden dim: pure VALU work (mul/add/max), scalar
    # weights broadcast from SMEM, no (H, TR, 128) temporary, no XLU reduce.
    for k in range(hdim):
        w1k = params_ref[k]
        b1k = params_ref[hdim + k]
        w2k = params_ref[2 * hdim + k]
        acc = acc + w2k * jnp.maximum(x * w1k + b1k, 0.0)
    b2 = params_ref[3 * hdim]
    o_ref[...] = (acc + b2).astype(o_ref.dtype)


def net_forward(x, w1, b1, w2, b2):
    """x: (N, F) with F == 1; w1: (F, H); b1: (H,); w2: (H, O) with O == 1; b2: (O,)."""
    n, f = x.shape
    hdim = w1.shape[1]
    o = w2.shape[1]
    assert f == 1 and o == 1, "VPU path is specialized to F=1, O=1"

    # ---- batch layout: (rows, 128) lane-dense, sublane-dense ----
    n_lanepad = _round_up(n, LANES)
    rows = n_lanepad // LANES
    if rows <= ROWS_PER_TILE_MAX:
        tr = rows                      # single grid step; block == full array
        rows_pad = rows
    else:
        tr = ROWS_PER_TILE_MAX        # multiple of 8; multi-step, pipelined
        rows_pad = _round_up(rows, tr)

    total_pad = rows_pad * LANES
    x_flat = x.reshape(-1)
    if total_pad != n:
        x_flat = jnp.pad(x_flat, (0, total_pad - n))
    x2d = x_flat.reshape(rows_pad, LANES)

    # ---- one flat parameter slab -> SMEM (single DMA) ----
    params = jnp.concatenate(
        [w1.reshape(-1), b1.reshape(-1), w2.reshape(-1), b2.reshape(-1)]
    ).astype(jnp.float32)              # f32[3*hdim + 1]

    grid = (rows_pad // tr,)

    out2d = pl.pallas_call(
        functools.partial(mlp_kernel, hdim=hdim),
        out_shape=jax.ShapeDtypeStruct((rows_pad, LANES), x.dtype),
        grid_spec=pltpu.PrefetchScalarGridSpec(
            num_scalar_prefetch=0,
            grid=grid,
            in_specs=[
                # whole parameter slab, resident in SMEM for the entire grid
                pl.BlockSpec(memory_space=pltpu.MemorySpace.SMEM),
                # x tiles stream through VMEM, default double-buffered
                pl.BlockSpec((tr, LANES), lambda i: (i, 0)),
            ],
            out_specs=pl.BlockSpec((tr, LANES), lambda i: (i, 0)),
        ),
        compiler_params=pltpu.CompilerParams(
            dimension_semantics=("parallel",),
        ),
        cost_estimate=pl.CostEstimate(
            flops=5 * total_pad * hdim,
            transcendentals=0,
            bytes_accessed=4 * (2 * total_pad + 3 * hdim + 1),
        ),
    )(params, x2d)

    # Back to the PyTorch (N, O) layout; drop padding.
    return out2d.reshape(-1)[:n].reshape(n, 1)


def init_params(key, n_feature, n_hidden, n_output):
    """Deterministic init mimicking torch.nn.Linear (uniform +/- 1/sqrt(fan_in))."""
    k1, k2, k3, k4 = jax.random.split(key, 4)
    lim1 = 1.0 / jnp.sqrt(jnp.float32(n_feature))
    lim2 = 1.0 / jnp.sqrt(jnp.float32(n_hidden))
    # Stored as (in, out) so the reference does x @ W directly
    # (torch stores (out, in) and computes x @ W^T — same math).
    w1 = jax.random.uniform(k1, (n_feature, n_hidden), jnp.float32, -lim1, lim1)
    b1 = jax.random.uniform(k2, (n_hidden,), jnp.float32, -lim1, lim1)
    w2 = jax.random.uniform(k3, (n_hidden, n_output), jnp.float32, -lim2, lim2)
    b2 = jax.random.uniform(k4, (n_output,), jnp.float32, -lim2, lim2)
    return w1, b1, w2, b2


if __name__ == "__main__":
    # Mirrors the script: x = linspace(-1, 1, 100).unsqueeze(1) -> (100, 1)
    n_feature, n_hidden, n_output = 1, 32, 1
    x = jnp.linspace(-1.0, 1.0, 100, dtype=jnp.float32)[:, None]

    key = jax.random.PRNGKey(0)
    w1, b1, w2, b2 = init_params(key, n_feature, n_hidden, n_output)

    out = net_forward(x, w1, b1, w2, b2)
    out = jax.block_until_ready(out)

    # Pure-JAX reference for sanity
    ref = jnp.maximum(x @ w1 + b1, 0.0) @ w2 + b2
    assert out.shape == (100, n_output)
    assert jnp.allclose(out, ref, atol=1e-5), "mismatch vs reference"

    print("KERNEL_OK")
</pallas_src>

<mosaic_0001>
module attributes {stable_mosaic.version = 11 : i64} {
  func.func @mlp_kernel(%arg0: i32, %arg1: memref<97xf32, #tpu.memory_space<smem>>, %arg2: memref<1x128xf32, #tpu.memory_space<vmem>>, %arg3: memref<1x128xf32, #tpu.memory_space<vmem>>) attributes {dimension_semantics = [#tpu.dimension_semantics<parallel>], iteration_bounds = array<i64: 1>, scalar_prefetch = 0 : i64, scratch_operands = 0 : i64, tpu.core_type = #tpu.core_type<tc>, window_params = [{transform_indices = @transform_0, window_bounds = array<i64: 97>}, {transform_indices = @transform_1, window_bounds = array<i64: 1, 128>}, {transform_indices = @transform_2, window_bounds = array<i64: 1, 128>}]} {
    %c0 = arith.constant 0 : index
    %c0_0 = arith.constant 0 : index
    %0 = vector.load %arg2[%c0, %c0_0] : memref<1x128xf32, #tpu.memory_space<vmem>>, vector<1x128xf32>
    %cst = arith.constant 0.000000e+00 : f32
    %1 = vector.broadcast %cst : f32 to vector<1x128xf32>
    %c0_1 = arith.constant 0 : index
    %2 = memref.load %arg1[%c0_1] : memref<97xf32, #tpu.memory_space<smem>>
    %c32 = arith.constant 32 : index
    %3 = memref.load %arg1[%c32] : memref<97xf32, #tpu.memory_space<smem>>
    %c64 = arith.constant 64 : index
    %4 = memref.load %arg1[%c64] : memref<97xf32, #tpu.memory_space<smem>>
    %5 = vector.broadcast %2 : f32 to vector<1x128xf32>
    %6 = arith.mulf %0, %5 : vector<1x128xf32>
    %7 = vector.broadcast %3 : f32 to vector<1x128xf32>
    %8 = arith.addf %6, %7 : vector<1x128xf32>
    %cst_2 = arith.constant 0.000000e+00 : f32
    %9 = vector.broadcast %cst_2 : f32 to vector<1x128xf32>
    %10 = arith.maximumf %8, %9 : vector<1x128xf32>
    %11 = vector.broadcast %4 : f32 to vector<1x128xf32>
    %12 = arith.mulf %11, %10 : vector<1x128xf32>
    %13 = arith.addf %1, %12 : vector<1x128xf32>
    %c1 = arith.constant 1 : index
    %14 = memref.load %arg1[%c1] : memref<97xf32, #tpu.memory_space<smem>>
    %c33 = arith.constant 33 : index
    %15 = memref.load %arg1[%c33] : memref<97xf32, #tpu.memory_space<smem>>
    %c65 = arith.constant 65 : index
    %16 = memref.load %arg1[%c65] : memref<97xf32, #tpu.memory_space<smem>>
    %17 = vector.broadcast %14 : f32 to vector<1x128xf32>
    %18 = arith.mulf %0, %17 : vector<1x128xf32>
    %19 = vector.broadcast %15 : f32 to vector<1x128xf32>
    %20 = arith.addf %18, %19 : vector<1x128xf32>
    %cst_3 = arith.constant 0.000000e+00 : f32
    %21 = vector.broadcast %cst_3 : f32 to vector<1x128xf32>
    %22 = arith.maximumf %20, %21 : vector<1x128xf32>
    %23 = vector.broadcast %16 : f32 to vector<1x128xf32>
    %24 = arith.mulf %23, %22 : vector<1x128xf32>
    %25 = arith.addf %13, %24 : vector<1x128xf32>
    %c2 = arith.constant 2 : index
    %26 = memref.load %arg1[%c2] : memref<97xf32, #tpu.memory_space<smem>>
    %c34 = arith.constant 34 : index
    %27 = memref.load %arg1[%c34] : memref<97xf32, #tpu.memory_space<smem>>
    %c66 = arith.constant 66 : index
    %28 = memref.load %arg1[%c66] : memref<97xf32, #tpu.memory_space<smem>>
    %29 = vector.broadcast %26 : f32 to vector<1x128xf32>
    %30 = arith.mulf %0, %29 : vector<1x128xf32>
    %31 = vector.broadcast %27 : f32 to vector<1x128xf32>
    %32 = arith.addf %30, %31 : vector<1x128xf32>
    %cst_4 = arith.constant 0.000000e+00 : f32
    %33 = vector.broadcast %cst_4 : f32 to vector<1x128xf32>
    %34 = arith.maximumf %32, %33 : vector<1x128xf32>
    %35 = vector.broadcast %28 : f32 to vector<1x128xf32>
    %36 = arith.mulf %35, %34 : vector<1x128xf32>
    %37 = arith.addf %25, %36 : vector<1x128xf32>
    %c3 = arith.constant 3 : index
    %38 = memref.load %arg1[%c3] : memref<97xf32, #tpu.memory_space<smem>>
    %c35 = arith.constant 35 : index
    %39 = memref.load %arg1[%c35] : memref<97xf32, #tpu.memory_space<smem>>
    %c67 = arith.constant 67 : index
    %40 = memref.load %arg1[%c67] : memref<97xf32, #tpu.memory_space<smem>>
    %41 = vector.broadcast %38 : f32 to vector<1x128xf32>
    %42 = arith.mulf %0, %41 : vector<1x128xf32>
    %43 = vector.broadcast %39 : f32 to vector<1x128xf32>
    %44 = arith.addf %42, %43 : vector<1x128xf32>
    %cst_5 = arith.constant 0.000000e+00 : f32
    %45 = vector.broadcast %cst_5 : f32 to vector<1x128xf32>
    %46 = arith.maximumf %44, %45 : vector<1x128xf32>
    %47 = vector.broadcast %40 : f32 to vector<1x128xf32>
    %48 = arith.mulf %47, %46 : vector<1x128xf32>
    %49 = arith.addf %37, %48 : vector<1x128xf32>
    %c4 = arith.constant 4 : index
    %50 = memref.load %arg1[%c4] : memref<97xf32, #tpu.memory_space<smem>>
    %c36 = arith.constant 36 : index
    %51 = memref.load %arg1[%c36] : memref<97xf32, #tpu.memory_space<smem>>
    %c68 = arith.constant 68 : index
    %52 = memref.load %arg1[%c68] : memref<97xf32, #tpu.memory_space<smem>>
    %53 = vector.broadcast %50 : f32 to vector<1x128xf32>
    %54 = arith.mulf %0, %53 : vector<1x128xf32>
    %55 = vector.broadcast %51 : f32 to vector<1x128xf32>
    %56 = arith.addf %54, %55 : vector<1x128xf32>
    %cst_6 = arith.constant 0.000000e+00 : f32
    %57 = vector.broadcast %cst_6 : f32 to vector<1x128xf32>
    %58 = arith.maximumf %56, %57 : vector<1x128xf32>
    %59 = vector.broadcast %52 : f32 to vector<1x128xf32>
    %60 = arith.mulf %59, %58 : vector<1x128xf32>
    %61 = arith.addf %49, %60 : vector<1x128xf32>
    %c5 = arith.constant 5 : index
    %62 = memref.load %arg1[%c5] : memref<97xf32, #tpu.memory_space<smem>>
    %c37 = arith.constant 37 : index
    %63 = memref.load %arg1[%c37] : memref<97xf32, #tpu.memory_space<smem>>
    %c69 = arith.constant 69 : index
    %64 = memref.load %arg1[%c69] : memref<97xf32, #tpu.memory_space<smem>>
    %65 = vector.broadcast %62 : f32 to vector<1x128xf32>
    %66 = arith.mulf %0, %65 : vector<1x128xf32>
    %67 = vector.broadcast %63 : f32 to vector<1x128xf32>
    %68 = arith.addf %66, %67 : vector<1x128xf32>
    %cst_7 = arith.constant 0.000000e+00 : f32
    %69 = vector.broadcast %cst_7 : f32 to vector<1x128xf32>
    %70 = arith.maximumf %68, %69 : vector<1x128xf32>
    %71 = vector.broadcast %64 : f32 to vector<1x128xf32>
    %72 = arith.mulf %71, %70 : vector<1x128xf32>
    %73 = arith.addf %61, %72 : vector<1x128xf32>
    %c6 = arith.constant 6 : index
    %74 = memref.load %arg1[%c6] : memref<97xf32, #tpu.memory_space<smem>>
    %c38 = arith.constant 38 : index
    %75 = memref.load %arg1[%c38] : memref<97xf32, #tpu.memory_space<smem>>
    %c70 = arith.constant 70 : index
    %76 = memref.load %arg1[%c70] : memref<97xf32, #tpu.memory_space<smem>>
    %77 = vector.broadcast %74 : f32 to vector<1x128xf32>
    %78 = arith.mulf %0, %77 : vector<1x128xf32>
    %79 = vector.broadcast %75 : f32 to vector<1x128xf32>
    %80 = arith.addf %78, %79 : vector<1x128xf32>
    %cst_8 = arith.constant 0.000000e+00 : f32
    %81 = vector.broadcast %cst_8 : f32 to vector<1x128xf32>
    %82 = arith.maximumf %80, %81 : vector<1x128xf32>
    %83 = vector.broadcast %76 : f32 to vector<1x128xf32>
    %84 = arith.mulf %83, %82 : vector<1x128xf32>
    %85 = arith.addf %73, %84 : vector<1x128xf32>
    %c7 = arith.constant 7 : index
    %86 = memref.load %arg1[%c7] : memref<97xf32, #tpu.memory_space<smem>>
    %c39 = arith.constant 39 : index
    %87 = memref.load %arg1[%c39] : memref<97xf32, #tpu.memory_space<smem>>
    %c71 = arith.constant 71 : index
    %88 = memref.load %arg1[%c71] : memref<97xf32, #tpu.memory_space<smem>>
    %89 = vector.broadcast %86 : f32 to vector<1x128xf32>
    %90 = arith.mulf %0, %89 : vector<1x128xf32>
    %91 = vector.broadcast %87 : f32 to vector<1x128xf32>
    %92 = arith.addf %90, %91 : vector<1x128xf32>
    %cst_9 = arith.constant 0.000000e+00 : f32
    %93 = vector.broadcast %cst_9 : f32 to vector<1x128xf32>
    %94 = arith.maximumf %92, %93 : vector<1x128xf32>
    %95 = vector.broadcast %88 : f32 to vector<1x128xf32>
    %96 = arith.mulf %95, %94 : vector<1x128xf32>
    %97 = arith.addf %85, %96 : vector<1x128xf32>
    %c8 = arith.constant 8 : index
    %98 = memref.load %arg1[%c8] : memref<97xf32, #tpu.memory_space<smem>>
    %c40 = arith.constant 40 : index
    %99 = memref.load %arg1[%c40] : memref<97xf32, #tpu.memory_space<smem>>
    %c72 = arith.constant 72 : index
    %100 = memref.load %arg1[%c72] : memref<97xf32, #tpu.memory_space<smem>>
    %101 = vector.broadcast %98 : f32 to vector<1x128xf32>
    %102 = arith.mulf %0, %101 : vector<1x128xf32>
    %103 = vector.broadcast %99 : f32 to vector<1x128xf32>
    %104 = arith.addf %102, %103 : vector<1x128xf32>
    %cst_10 = arith.constant 0.000000e+00 : f32
    %105 = vector.broadcast %cst_10 : f32 to vector<1x128xf32>
    %106 = arith.maximumf %104, %105 : vector<1x128xf32>
    %107 = vector.broadcast %100 : f32 to vector<1x128xf32>
    %108 = arith.mulf %107, %106 : vector<1x128xf32>
    %109 = arith.addf %97, %108 : vector<1x128xf32>
    %c9 = arith.constant 9 : index
    %110 = memref.load %arg1[%c9] : memref<97xf32, #tpu.memory_space<smem>>
    %c41 = arith.constant 41 : index
    %111 = memref.load %arg1[%c41] : memref<97xf32, #tpu.memory_space<smem>>
    %c73 = arith.constant 73 : index
    %112 = memref.load %arg1[%c73] : memref<97xf32, #tpu.memory_space<smem>>
    %113 = vector.broadcast %110 : f32 to vector<1x128xf32>
    %114 = arith.mulf %0, %113 : vector<1x128xf32>
    %115 = vector.broadcast %111 : f32 to vector<1x128xf32>
    %116 = arith.addf %114, %115 : vector<1x128xf32>
    %cst_11 = arith.constant 0.000000e+00 : f32
    %117 = vector.broadcast %cst_11 : f32 to vector<1x128xf32>
    %118 = arith.maximumf %116, %117 : vector<1x128xf32>
    %119 = vector.broadcast %112 : f32 to vector<1x128xf32>
    %120 = arith.mulf %119, %118 : vector<1x128xf32>
    %121 = arith.addf %109, %120 : vector<1x128xf32>
    %c10 = arith.constant 10 : index
    %122 = memref.load %arg1[%c10] : memref<97xf32, #tpu.memory_space<smem>>
    %c42 = arith.constant 42 : index
    %123 = memref.load %arg1[%c42] : memref<97xf32, #tpu.memory_space<smem>>
    %c74 = arith.constant 74 : index
    %124 = memref.load %arg1[%c74] : memref<97xf32, #tpu.memory_space<smem>>
    %125 = vector.broadcast %122 : f32 to vector<1x128xf32>
    %126 = arith.mulf %0, %125 : vector<1x128xf32>
    %127 = vector.broadcast %123 : f32 to vector<1x128xf32>
    %128 = arith.addf %126, %127 : vector<1x128xf32>
    %cst_12 = arith.constant 0.000000e+00 : f32
    %129 = vector.broadcast %cst_12 : f32 to vector<1x128xf32>
    %130 = arith.maximumf %128, %129 : vector<1x128xf32>
    %131 = vector.broadcast %124 : f32 to vector<1x128xf32>
    %132 = arith.mulf %131, %130 : vector<1x128xf32>
    %133 = arith.addf %121, %132 : vector<1x128xf32>
    %c11 = arith.constant 11 : index
    %134 = memref.load %arg1[%c11] : memref<97xf32, #tpu.memory_space<smem>>
    %c43 = arith.constant 43 : index
    %135 = memref.load %arg1[%c43] : memref<97xf32, #tpu.memory_space<smem>>
    %c75 = arith.constant 75 : index
    %136 = memref.load %arg1[%c75] : memref<97xf32, #tpu.memory_space<smem>>
    %137 = vector.broadcast %134 : f32 to vector<1x128xf32>
    %138 = arith.mulf %0, %137 : vector<1x128xf32>
    %139 = vector.broadcast %135 : f32 to vector<1x128xf32>
    %140 = arith.addf %138, %139 : vector<1x128xf32>
    %cst_13 = arith.constant 0.000000e+00 : f32
    %141 = vector.broadcast %cst_13 : f32 to vector<1x128xf32>
    %142 = arith.maximumf %140, %141 : vector<1x128xf32>
    %143 = vector.broadcast %136 : f32 to vector<1x128xf32>
    %144 = arith.mulf %143, %142 : vector<1x128xf32>
    %145 = arith.addf %133, %144 : vector<1x128xf32>
    %c12 = arith.constant 12 : index
    %146 = memref.load %arg1[%c12] : memref<97xf32, #tpu.memory_space<smem>>
    %c44 = arith.constant 44 : index
    %147 = memref.load %arg1[%c44] : memref<97xf32, #tpu.memory_space<smem>>
    %c76 = arith.constant 76 : index
    %148 = memref.load %arg1[%c76] : memref<97xf32, #tpu.memory_space<smem>>
    %149 = vector.broadcast %146 : f32 to vector<1x128xf32>
    %150 = arith.mulf %0, %149 : vector<1x128xf32>
    %151 = vector.broadcast %147 : f32 to vector<1x128xf32>
    %152 = arith.addf %150, %151 : vector<1x128xf32>
    %cst_14 = arith.constant 0.000000e+00 : f32
    %153 = vector.broadcast %cst_14 : f32 to vector<1x128xf32>
    %154 = arith.maximumf %152, %153 : vector<1x128xf32>
    %155 = vector.broadcast %148 : f32 to vector<1x128xf32>
    %156 = arith.mulf %155, %154 : vector<1x128xf32>
    %157 = arith.addf %145, %156 : vector<1x128xf32>
    %c13 = arith.constant 13 : index
    %158 = memref.load %arg1[%c13] : memref<97xf32, #tpu.memory_space<smem>>
    %c45 = arith.constant 45 : index
    %159 = memref.load %arg1[%c45] : memref<97xf32, #tpu.memory_space<smem>>
    %c77 = arith.constant 77 : index
    %160 = memref.load %arg1[%c77] : memref<97xf32, #tpu.memory_space<smem>>
    %161 = vector.broadcast %158 : f32 to vector<1x128xf32>
    %162 = arith.mulf %0, %161 : vector<1x128xf32>
    %163 = vector.broadcast %159 : f32 to vector<1x128xf32>
    %164 = arith.addf %162, %163 : vector<1x128xf32>
    %cst_15 = arith.constant 0.000000e+00 : f32
    %165 = vector.broadcast %cst_15 : f32 to vector<1x128xf32>
    %166 = arith.maximumf %164, %165 : vector<1x128xf32>
    %167 = vector.broadcast %160 : f32 to vector<1x128xf32>
    %168 = arith.mulf %167, %166 : vector<1x128xf32>
    %169 = arith.addf %157, %168 : vector<1x128xf32>
    %c14 = arith.constant 14 : index
    %170 = memref.load %arg1[%c14] : memref<97xf32, #tpu.memory_space<smem>>
    %c46 = arith.constant 46 : index
    %171 = memref.load %arg1[%c46] : memref<97xf32, #tpu.memory_space<smem>>
    %c78 = arith.constant 78 : index
    %172 = memref.load %arg1[%c78] : memref<97xf32, #tpu.memory_space<smem>>
    %173 = vector.broadcast %170 : f32 to vector<1x128xf32>
    %174 = arith.mulf %0, %173 : vector<1x128xf32>
    %175 = vector.broadcast %171 : f32 to vector<1x128xf32>
    %176 = arith.addf %174, %175 : vector<1x128xf32>
    %cst_16 = arith.constant 0.000000e+00 : f32
    %177 = vector.broadcast %cst_16 : f32 to vector<1x128xf32>
    %178 = arith.maximumf %176, %177 : vector<1x128xf32>
    %179 = vector.broadcast %172 : f32 to vector<1x128xf32>
    %180 = arith.mulf %179, %178 : vector<1x128xf32>
    %181 = arith.addf %169, %180 : vector<1x128xf32>
    %c15 = arith.constant 15 : index
    %182 = memref.load %arg1[%c15] : memref<97xf32, #tpu.memory_space<smem>>
    %c47 = arith.constant 47 : index
    %183 = memref.load %arg1[%c47] : memref<97xf32, #tpu.memory_space<smem>>
    %c79 = arith.constant 79 : index
    %184 = memref.load %arg1[%c79] : memref<97xf32, #tpu.memory_space<smem>>
    %185 = vector.broadcast %182 : f32 to vector<1x128xf32>
    %186 = arith.mulf %0, %185 : vector<1x128xf32>
    %187 = vector.broadcast %183 : f32 to vector<1x128xf32>
    %188 = arith.addf %186, %187 : vector<1x128xf32>
    %cst_17 = arith.constant 0.000000e+00 : f32
    %189 = vector.broadcast %cst_17 : f32 to vector<1x128xf32>
    %190 = arith.maximumf %188, %189 : vector<1x128xf32>
    %191 = vector.broadcast %184 : f32 to vector<1x128xf32>
    %192 = arith.mulf %191, %190 : vector<1x128xf32>
    %193 = arith.addf %181, %192 : vector<1x128xf32>
    %c16 = arith.constant 16 : index
    %194 = memref.load %arg1[%c16] : memref<97xf32, #tpu.memory_space<smem>>
    %c48 = arith.constant 48 : index
    %195 = memref.load %arg1[%c48] : memref<97xf32, #tpu.memory_space<smem>>
    %c80 = arith.constant 80 : index
    %196 = memref.load %arg1[%c80] : memref<97xf32, #tpu.memory_space<smem>>
    %197 = vector.broadcast %194 : f32 to vector<1x128xf32>
    %198 = arith.mulf %0, %197 : vector<1x128xf32>
    %199 = vector.broadcast %195 : f32 to vector<1x128xf32>
    %200 = arith.addf %198, %199 : vector<1x128xf32>
    %cst_18 = arith.constant 0.000000e+00 : f32
    %201 = vector.broadcast %cst_18 : f32 to vector<1x128xf32>
    %202 = arith.maximumf %200, %201 : vector<1x128xf32>
    %203 = vector.broadcast %196 : f32 to vector<1x128xf32>
    %204 = arith.mulf %203, %202 : vector<1x128xf32>
    %205 = arith.addf %193, %204 : vector<1x128xf32>
    %c17 = arith.constant 17 : index
    %206 = memref.load %arg1[%c17] : memref<97xf32, #tpu.memory_space<smem>>
    %c49 = arith.constant 49 : index
    %207 = memref.load %arg1[%c49] : memref<97xf32, #tpu.memory_space<smem>>
    %c81 = arith.constant 81 : index
    %208 = memref.load %arg1[%c81] : memref<97xf32, #tpu.memory_space<smem>>
    %209 = vector.broadcast %206 : f32 to vector<1x128xf32>
    %210 = arith.mulf %0, %209 : vector<1x128xf32>
    %211 = vector.broadcast %207 : f32 to vector<1x128xf32>
    %212 = arith.addf %210, %211 : vector<1x128xf32>
    %cst_19 = arith.constant 0.000000e+00 : f32
    %213 = vector.broadcast %cst_19 : f32 to vector<1x128xf32>
    %214 = arith.maximumf %212, %213 : vector<1x128xf32>
    %215 = vector.broadcast %208 : f32 to vector<1x128xf32>
    %216 = arith.mulf %215, %214 : vector<1x128xf32>
    %217 = arith.addf %205, %216 : vector<1x128xf32>
    %c18 = arith.constant 18 : index
    %218 = memref.load %arg1[%c18] : memref<97xf32, #tpu.memory_space<smem>>
    %c50 = arith.constant 50 : index
    %219 = memref.load %arg1[%c50] : memref<97xf32, #tpu.memory_space<smem>>
    %c82 = arith.constant 82 : index
    %220 = memref.load %arg1[%c82] : memref<97xf32, #tpu.memory_space<smem>>
    %221 = vector.broadcast %218 : f32 to vector<1x128xf32>
    %222 = arith.mulf %0, %221 : vector<1x128xf32>
    %223 = vector.broadcast %219 : f32 to vector<1x128xf32>
    %224 = arith.addf %222, %223 : vector<1x128xf32>
    %cst_20 = arith.constant 0.000000e+00 : f32
    %225 = vector.broadcast %cst_20 : f32 to vector<1x128xf32>
    %226 = arith.maximumf %224, %225 : vector<1x128xf32>
    %227 = vector.broadcast %220 : f32 to vector<1x128xf32>
    %228 = arith.mulf %227, %226 : vector<1x128xf32>
    %229 = arith.addf %217, %228 : vector<1x128xf32>
    %c19 = arith.constant 19 : index
    %230 = memref.load %arg1[%c19] : memref<97xf32, #tpu.memory_space<smem>>
    %c51 = arith.constant 51 : index
    %231 = memref.load %arg1[%c51] : memref<97xf32, #tpu.memory_space<smem>>
    %c83 = arith.constant 83 : index
    %232 = memref.load %arg1[%c83] : memref<97xf32, #tpu.memory_space<smem>>
    %233 = vector.broadcast %230 : f32 to vector<1x128xf32>
    %234 = arith.mulf %0, %233 : vector<1x128xf32>
    %235 = vector.broadcast %231 : f32 to vector<1x128xf32>
    %236 = arith.addf %234, %235 : vector<1x128xf32>
    %cst_21 = arith.constant 0.000000e+00 : f32
    %237 = vector.broadcast %cst_21 : f32 to vector<1x128xf32>
    %238 = arith.maximumf %236, %237 : vector<1x128xf32>
    %239 = vector.broadcast %232 : f32 to vector<1x128xf32>
    %240 = arith.mulf %239, %238 : vector<1x128xf32>
    %241 = arith.addf %229, %240 : vector<1x128xf32>
    %c20 = arith.constant 20 : index
    %242 = memref.load %arg1[%c20] : memref<97xf32, #tpu.memory_space<smem>>
    %c52 = arith.constant 52 : index
    %243 = memref.load %arg1[%c52] : memref<97xf32, #tpu.memory_space<smem>>
    %c84 = arith.constant 84 : index
    %244 = memref.load %arg1[%c84] : memref<97xf32, #tpu.memory_space<smem>>
    %245 = vector.broadcast %242 : f32 to vector<1x128xf32>
    %246 = arith.mulf %0, %245 : vector<1x128xf32>
    %247 = vector.broadcast %243 : f32 to vector<1x128xf32>
    %248 = arith.addf %246, %247 : vector<1x128xf32>
    %cst_22 = arith.constant 0.000000e+00 : f32
    %249 = vector.broadcast %cst_22 : f32 to vector<1x128xf32>
    %250 = arith.maximumf %248, %249 : vector<1x128xf32>
    %251 = vector.broadcast %244 : f32 to vector<1x128xf32>
    %252 = arith.mulf %251, %250 : vector<1x128xf32>
    %253 = arith.addf %241, %252 : vector<1x128xf32>
    %c21 = arith.constant 21 : index
    %254 = memref.load %arg1[%c21] : memref<97xf32, #tpu.memory_space<smem>>
    %c53 = arith.constant 53 : index
    %255 = memref.load %arg1[%c53] : memref<97xf32, #tpu.memory_space<smem>>
    %c85 = arith.constant 85 : index
    %256 = memref.load %arg1[%c85] : memref<97xf32, #tpu.memory_space<smem>>
    %257 = vector.broadcast %254 : f32 to vector<1x128xf32>
    %258 = arith.mulf %0, %257 : vector<1x128xf32>
    %259 = vector.broadcast %255 : f32 to vector<1x128xf32>
    %260 = arith.addf %258, %259 : vector<1x128xf32>
    %cst_23 = arith.constant 0.000000e+00 : f32
    %261 = vector.broadcast %cst_23 : f32 to vector<1x128xf32>
    %262 = arith.maximumf %260, %261 : vector<1x128xf32>
    %263 = vector.broadcast %256 : f32 to vector<1x128xf32>
    %264 = arith.mulf %263, %262 : vector<1x128xf32>
    %265 = arith.addf %253, %264 : vector<1x128xf32>
    %c22 = arith.constant 22 : index
    %266 = memref.load %arg1[%c22] : memref<97xf32, #tpu.memory_space<smem>>
    %c54 = arith.constant 54 : index
    %267 = memref.load %arg1[%c54] : memref<97xf32, #tpu.memory_space<smem>>
    %c86 = arith.constant 86 : index
    %268 = memref.load %arg1[%c86] : memref<97xf32, #tpu.memory_space<smem>>
    %269 = vector.broadcast %266 : f32 to vector<1x128xf32>
    %270 = arith.mulf %0, %269 : vector<1x128xf32>
    %271 = vector.broadcast %267 : f32 to vector<1x128xf32>
    %272 = arith.addf %270, %271 : vector<1x128xf32>
    %cst_24 = arith.constant 0.000000e+00 : f32
    %273 = vector.broadcast %cst_24 : f32 to vector<1x128xf32>
    %274 = arith.maximumf %272, %273 : vector<1x128xf32>
    %275 = vector.broadcast %268 : f32 to vector<1x128xf32>
    %276 = arith.mulf %275, %274 : vector<1x128xf32>
    %277 = arith.addf %265, %276 : vector<1x128xf32>
    %c23 = arith.constant 23 : index
    %278 = memref.load %arg1[%c23] : memref<97xf32, #tpu.memory_space<smem>>
    %c55 = arith.constant 55 : index
    %279 = memref.load %arg1[%c55] : memref<97xf32, #tpu.memory_space<smem>>
    %c87 = arith.constant 87 : index
    %280 = memref.load %arg1[%c87] : memref<97xf32, #tpu.memory_space<smem>>
    %281 = vector.broadcast %278 : f32 to vector<1x128xf32>
    %282 = arith.mulf %0, %281 : vector<1x128xf32>
    %283 = vector.broadcast %279 : f32 to vector<1x128xf32>
    %284 = arith.addf %282, %283 : vector<1x128xf32>
    %cst_25 = arith.constant 0.000000e+00 : f32
    %285 = vector.broadcast %cst_25 : f32 to vector<1x128xf32>
    %286 = arith.maximumf %284, %285 : vector<1x128xf32>
    %287 = vector.broadcast %280 : f32 to vector<1x128xf32>
    %288 = arith.mulf %287, %286 : vector<1x128xf32>
    %289 = arith.addf %277, %288 : vector<1x128xf32>
    %c24 = arith.constant 24 : index
    %290 = memref.load %arg1[%c24] : memref<97xf32, #tpu.memory_space<smem>>
    %c56 = arith.constant 56 : index
    %291 = memref.load %arg1[%c56] : memref<97xf32, #tpu.memory_space<smem>>
    %c88 = arith.constant 88 : index
    %292 = memref.load %arg1[%c88] : memref<97xf32, #tpu.memory_space<smem>>
    %293 = vector.broadcast %290 : f32 to vector<1x128xf32>
    %294 = arith.mulf %0, %293 : vector<1x128xf32>
    %295 = vector.broadcast %291 : f32 to vector<1x128xf32>
    %296 = arith.addf %294, %295 : vector<1x128xf32>
    %cst_26 = arith.constant 0.000000e+00 : f32
    %297 = vector.broadcast %cst_26 : f32 to vector<1x128xf32>
    %298 = arith.maximumf %296, %297 : vector<1x128xf32>
    %299 = vector.broadcast %292 : f32 to vector<1x128xf32>
    %300 = arith.mulf %299, %298 : vector<1x128xf32>
    %301 = arith.addf %289, %300 : vector<1x128xf32>
    %c25 = arith.constant 25 : index
    %302 = memref.load %arg1[%c25] : memref<97xf32, #tpu.memory_space<smem>>
    %c57 = arith.constant 57 : index
    %303 = memref.load %arg1[%c57] : memref<97xf32, #tpu.memory_space<smem>>
    %c89 = arith.constant 89 : index
    %304 = memref.load %arg1[%c89] : memref<97xf32, #tpu.memory_space<smem>>
    %305 = vector.broadcast %302 : f32 to vector<1x128xf32>
    %306 = arith.mulf %0, %305 : vector<1x128xf32>
    %307 = vector.broadcast %303 : f32 to vector<1x128xf32>
    %308 = arith.addf %306, %307 : vector<1x128xf32>
    %cst_27 = arith.constant 0.000000e+00 : f32
    %309 = vector.broadcast %cst_27 : f32 to vector<1x128xf32>
    %310 = arith.maximumf %308, %309 : vector<1x128xf32>
    %311 = vector.broadcast %304 : f32 to vector<1x128xf32>
    %312 = arith.mulf %311, %310 : vector<1x128xf32>
    %313 = arith.addf %301, %312 : vector<1x128xf32>
    %c26 = arith.constant 26 : index
    %314 = memref.load %arg1[%c26] : memref<97xf32, #tpu.memory_space<smem>>
    %c58 = arith.constant 58 : index
    %315 = memref.load %arg1[%c58] : memref<97xf32, #tpu.memory_space<smem>>
    %c90 = arith.constant 90 : index
    %316 = memref.load %arg1[%c90] : memref<97xf32, #tpu.memory_space<smem>>
    %317 = vector.broadcast %314 : f32 to vector<1x128xf32>
    %318 = arith.mulf %0, %317 : vector<1x128xf32>
    %319 = vector.broadcast %315 : f32 to vector<1x128xf32>
    %320 = arith.addf %318, %319 : vector<1x128xf32>
    %cst_28 = arith.constant 0.000000e+00 : f32
    %321 = vector.broadcast %cst_28 : f32 to vector<1x128xf32>
    %322 = arith.maximumf %320, %321 : vector<1x128xf32>
    %323 = vector.broadcast %316 : f32 to vector<1x128xf32>
    %324 = arith.mulf %323, %322 : vector<1x128xf32>
    %325 = arith.addf %313, %324 : vector<1x128xf32>
    %c27 = arith.constant 27 : index
    %326 = memref.load %arg1[%c27] : memref<97xf32, #tpu.memory_space<smem>>
    %c59 = arith.constant 59 : index
    %327 = memref.load %arg1[%c59] : memref<97xf32, #tpu.memory_space<smem>>
    %c91 = arith.constant 91 : index
    %328 = memref.load %arg1[%c91] : memref<97xf32, #tpu.memory_space<smem>>
    %329 = vector.broadcast %326 : f32 to vector<1x128xf32>
    %330 = arith.mulf %0, %329 : vector<1x128xf32>
    %331 = vector.broadcast %327 : f32 to vector<1x128xf32>
    %332 = arith.addf %330, %331 : vector<1x128xf32>
    %cst_29 = arith.constant 0.000000e+00 : f32
    %333 = vector.broadcast %cst_29 : f32 to vector<1x128xf32>
    %334 = arith.maximumf %332, %333 : vector<1x128xf32>
    %335 = vector.broadcast %328 : f32 to vector<1x128xf32>
    %336 = arith.mulf %335, %334 : vector<1x128xf32>
    %337 = arith.addf %325, %336 : vector<1x128xf32>
    %c28 = arith.constant 28 : index
    %338 = memref.load %arg1[%c28] : memref<97xf32, #tpu.memory_space<smem>>
    %c60 = arith.constant 60 : index
    %339 = memref.load %arg1[%c60] : memref<97xf32, #tpu.memory_space<smem>>
    %c92 = arith.constant 92 : index
    %340 = memref.load %arg1[%c92] : memref<97xf32, #tpu.memory_space<smem>>
    %341 = vector.broadcast %338 : f32 to vector<1x128xf32>
    %342 = arith.mulf %0, %341 : vector<1x128xf32>
    %343 = vector.broadcast %339 : f32 to vector<1x128xf32>
    %344 = arith.addf %342, %343 : vector<1x128xf32>
    %cst_30 = arith.constant 0.000000e+00 : f32
    %345 = vector.broadcast %cst_30 : f32 to vector<1x128xf32>
    %346 = arith.maximumf %344, %345 : vector<1x128xf32>
    %347 = vector.broadcast %340 : f32 to vector<1x128xf32>
    %348 = arith.mulf %347, %346 : vector<1x128xf32>
    %349 = arith.addf %337, %348 : vector<1x128xf32>
    %c29 = arith.constant 29 : index
    %350 = memref.load %arg1[%c29] : memref<97xf32, #tpu.memory_space<smem>>
    %c61 = arith.constant 61 : index
    %351 = memref.load %arg1[%c61] : memref<97xf32, #tpu.memory_space<smem>>
    %c93 = arith.constant 93 : index
    %352 = memref.load %arg1[%c93] : memref<97xf32, #tpu.memory_space<smem>>
    %353 = vector.broadcast %350 : f32 to vector<1x128xf32>
    %354 = arith.mulf %0, %353 : vector<1x128xf32>
    %355 = vector.broadcast %351 : f32 to vector<1x128xf32>
    %356 = arith.addf %354, %355 : vector<1x128xf32>
    %cst_31 = arith.constant 0.000000e+00 : f32
    %357 = vector.broadcast %cst_31 : f32 to vector<1x128xf32>
    %358 = arith.maximumf %356, %357 : vector<1x128xf32>
    %359 = vector.broadcast %352 : f32 to vector<1x128xf32>
    %360 = arith.mulf %359, %358 : vector<1x128xf32>
    %361 = arith.addf %349, %360 : vector<1x128xf32>
    %c30 = arith.constant 30 : index
    %362 = memref.load %arg1[%c30] : memref<97xf32, #tpu.memory_space<smem>>
    %c62 = arith.constant 62 : index
    %363 = memref.load %arg1[%c62] : memref<97xf32, #tpu.memory_space<smem>>
    %c94 = arith.constant 94 : index
    %364 = memref.load %arg1[%c94] : memref<97xf32, #tpu.memory_space<smem>>
    %365 = vector.broadcast %362 : f32 to vector<1x128xf32>
    %366 = arith.mulf %0, %365 : vector<1x128xf32>
    %367 = vector.broadcast %363 : f32 to vector<1x128xf32>
    %368 = arith.addf %366, %367 : vector<1x128xf32>
    %cst_32 = arith.constant 0.000000e+00 : f32
    %369 = vector.broadcast %cst_32 : f32 to vector<1x128xf32>
    %370 = arith.maximumf %368, %369 : vector<1x128xf32>
    %371 = vector.broadcast %364 : f32 to vector<1x128xf32>
    %372 = arith.mulf %371, %370 : vector<1x128xf32>
    %373 = arith.addf %361, %372 : vector<1x128xf32>
    %c31 = arith.constant 31 : index
    %374 = memref.load %arg1[%c31] : memref<97xf32, #tpu.memory_space<smem>>
    %c63 = arith.constant 63 : index
    %375 = memref.load %arg1[%c63] : memref<97xf32, #tpu.memory_space<smem>>
    %c95 = arith.constant 95 : index
    %376 = memref.load %arg1[%c95] : memref<97xf32, #tpu.memory_space<smem>>
    %377 = vector.broadcast %374 : f32 to vector<1x128xf32>
    %378 = arith.mulf %0, %377 : vector<1x128xf32>
    %379 = vector.broadcast %375 : f32 to vector<1x128xf32>
    %380 = arith.addf %378, %379 : vector<1x128xf32>
    %cst_33 = arith.constant 0.000000e+00 : f32
    %381 = vector.broadcast %cst_33 : f32 to vector<1x128xf32>
    %382 = arith.maximumf %380, %381 : vector<1x128xf32>
    %383 = vector.broadcast %376 : f32 to vector<1x128xf32>
    %384 = arith.mulf %383, %382 : vector<1x128xf32>
    %385 = arith.addf %373, %384 : vector<1x128xf32>
    %c96 = arith.constant 96 : index
    %386 = memref.load %arg1[%c96] : memref<97xf32, #tpu.memory_space<smem>>
    %387 = vector.broadcast %386 : f32 to vector<1x128xf32>
    %388 = arith.addf %385, %387 : vector<1x128xf32>
    %c0_34 = arith.constant 0 : index
    %c0_35 = arith.constant 0 : index
    %389 = vector.load %arg3[%c0_34, %c0_35] : memref<1x128xf32, #tpu.memory_space<vmem>>, vector<1x128xf32>
    tpu.vector_store %arg3[%c0_34, %c0_35], %388 {strides = array<i32>} : memref<1x128xf32, #tpu.memory_space<vmem>>, vector<1x128xf32>,
    return
  }
  func.func @transform_0(%arg0: i32) -> i32 {
    %c0_i32 = arith.constant 0 : i32
    %c0_i32_0 = arith.constant 0 : i32
    return %c0_i32 : i32
  }
  func.func @transform_1(%arg0: i32) -> (i32, i32) {
    %c0_i32 = arith.constant 0 : i32
    %c0_i32_0 = arith.constant 0 : i32
    return %arg0, %c0_i32 : i32, i32
  }
  func.func @transform_2(%arg0: i32) -> (i32, i32) {
    %c0_i32 = arith.constant 0 : i32
    %c0_i32_0 = arith.constant 0 : i32
    return %arg0, %c0_i32 : i32, i32
  }
}

</mosaic_0001>

<llo_original>
// kernel: tpu_custom_call.1
$region0: #{tpu_custom_call.1}
  #allocation0 [shape = 'u32[]', space=smem, size = 0x4, offset = 0x4, fixed_abs, tag = 'smem constant byte address 0x4 - core index']
  #allocation1 [shape = 'u32[144,128]{1,0:T(1,128)}', space=vmem, size = 0x12000, scoped, tag = 'internal scratch']
  %s0 = inlined_call_operand.hbm [shape: f32[97], index: 0, kind: input, shape index: {}]
  %s1 = inlined_call_operand.vmem [shape: f32[1,128], index: 1, kind: input, shape index: {}]
  %s2 = inlined_call_operand.hbm [shape: f32[1,128], index: 2, kind: output, shape index: {}]
  %s3 = sld [smem:[#allocation0]]
  $region22: #{tpu_custom_call.1} parent=0
    _
  %s5 = ssub.s32 1, %s3
  %s6 = scalar_select 0, %s5, %s3
  $region1: #{tpu_custom_call.1} parent=0
    #allocation2 [shape = 'u8[512]{0}', space=smem, size = 0x200, scoped, tag = 'input window, operand 0, single buffered']
    #allocation3 [shape = 's32[1]{0}', space=sflag, size = 0x4, scoped, tag = 'scoped memory for tpu_custom_call.1']
    #allocation4 [shape = 's32[1]{0}', space=sflag, size = 0x4, scoped, tag = 'scoped memory for tpu_custom_call.1']
    #allocation5 [shape = 'u8[512]{0}', space=vmem, size = 0x400, scoped, tag = 'output window, operand 0, single buffered']
    %7 = vsyncpa [#allocation4], 0
    %8 = vsyncpa [#allocation3], 0
    // Predicated region
    $region2: #{tpu_custom_call.1} parent=1 // pred_check
      _
    $region3: #{tpu_custom_call.1} parent=1 // pred_check_branch
      %10 = sbr.rel (0) target = $region5
    $region4: #{tpu_custom_call.1} parent=1 // pred_region
      %s12 = ssub.s32 16, 16
      %13 = vsyncadd [#allocation4], %s12
      %16 = dma.hbm_to_smem %s0, 16, [#allocation2], [#allocation4]
    $region5: #{tpu_custom_call.1} parent=1 // pred_fallthru
      _
    // Predicated region
    $region6: #{tpu_custom_call.1} parent=1 // pred_check
      _
    $region7: #{tpu_custom_call.1} parent=1 // pred_check_branch
      %18 = sbr.rel (0) target = $region9
    $region8: #{tpu_custom_call.1} parent=1 // pred_region
      _
    $region9: #{tpu_custom_call.1} parent=1 // pred_fallthru
      _
    // Predicated region
    $region10: #{tpu_custom_call.1} parent=1 // pred_check
      _
    $region11: #{tpu_custom_call.1} parent=1 // pred_check_branch
      %20 = sbr.rel (0) target = $region13
    $region12: #{tpu_custom_call.1} parent=1 // pred_region
      %21 = dma.done [#allocation4], 16
    $region13: #{tpu_custom_call.1} parent=1 // pred_fallthru
      _
    %22 = sfence
    %v23 = vld [vmem:[%s1] sm:$0x1]
    %s24 = sld [smem:[#allocation2]]
    %s25 = sld [smem:[#allocation2 + $0x20]]
    %s26 = sld [smem:[#allocation2 + $0x40]]
    %v27 = vstv %s24
    %v28 = vmul.f32 %v23, %v27
    %v29 = vstv %s25
    %v30 = vadd.f32 %v28, %v29
    %v31 = vmax.f32 %v30, 0.0
    %v32 = vstv %s26
    %v33 = vmul.f32 %v32, %v31
    %v34 = vadd.f32 %v33, 0.0
    %s35 = sld [smem:[#allocation2 + $0x1]]
    %s36 = sld [smem:[#allocation2 + $0x21]]
    %s37 = sld [smem:[#allocation2 + $0x41]]
    %v38 = vstv %s35
    %v39 = vmul.f32 %v23, %v38
    %v40 = vstv %s36
    %v41 = vadd.f32 %v39, %v40
    %v42 = vmax.f32 %v41, 0.0
    %v43 = vstv %s37
    %v44 = vmul.f32 %v43, %v42
    %v45 = vadd.f32 %v34, %v44
    %s46 = sld [smem:[#allocation2 + $0x2]]
    %s47 = sld [smem:[#allocation2 + $0x22]]
    %s48 = sld [smem:[#allocation2 + $0x42]]
    %v49 = vstv %s46
    %v50 = vmul.f32 %v23, %v49
    %v51 = vstv %s47
    %v52 = vadd.f32 %v50, %v51
    %v53 = vmax.f32 %v52, 0.0
    %v54 = vstv %s48
    %v55 = vmul.f32 %v54, %v53
    %v56 = vadd.f32 %v45, %v55
    %s57 = sld [smem:[#allocation2 + $0x3]]
    %s58 = sld [smem:[#allocation2 + $0x23]]
    %s59 = sld [smem:[#allocation2 + $0x43]]
    %v60 = vstv %s57
    %v61 = vmul.f32 %v23, %v60
    %v62 = vstv %s58
    %v63 = vadd.f32 %v61, %v62
    %v64 = vmax.f32 %v63, 0.0
    %v65 = vstv %s59
    %v66 = vmul.f32 %v65, %v64
    %v67 = vadd.f32 %v56, %v66
    %s68 = sld [smem:[#allocation2 + $0x4]]
    %s69 = sld [smem:[#allocation2 + $0x24]]
    %s70 = sld [smem:[#allocation2 + $0x44]]
    %v71 = vstv %s68
    %v72 = vmul.f32 %v23, %v71
    %v73 = vstv %s69
    %v74 = vadd.f32 %v72, %v73
    %v75 = vmax.f32 %v74, 0.0
    %v76 = vstv %s70
    %v77 = vmul.f32 %v76, %v75
    %v78 = vadd.f32 %v67, %v77
    %s79 = sld [smem:[#allocation2 + $0x5]]
    %s80 = sld [smem:[#allocation2 + $0x25]]
    %s81 = sld [smem:[#allocation2 + $0x45]]
    %v82 = vstv %s79
    %v83 = vmul.f32 %v23, %v82
    %v84 = vstv %s80
    %v85 = vadd.f32 %v83, %v84
    %v86 = vmax.f32 %v85, 0.0
    %v87 = vstv %s81
    %v88 = vmul.f32 %v87, %v86
    %v89 = vadd.f32 %v78, %v88
    %s90 = sld [smem:[#allocation2 + $0x6]]
    %s91 = sld [smem:[#allocation2 + $0x26]]
    %s92 = sld [smem:[#allocation2 + $0x46]]
    %v93 = vstv %s90
    %v94 = vmul.f32 %v23, %v93
    %v95 = vstv %s91
    %v96 = vadd.f32 %v94, %v95
    %v97 = vmax.f32 %v96, 0.0
    %v98 = vstv %s92
    %v99 = vmul.f32 %v98, %v97
    %v100 = vadd.f32 %v89, %v99
    %s101 = sld [smem:[#allocation2 + $0x7]]
    %s102 = sld [smem:[#allocation2 + $0x27]]
    %s103 = sld [smem:[#allocation2 + $0x47]]
    %v104 = vstv %s101
    %v105 = vmul.f32 %v23, %v104
    %v106 = vstv %s102
    %v107 = vadd.f32 %v105, %v106
    %v108 = vmax.f32 %v107, 0.0
    %v109 = vstv %s103
    %v110 = vmul.f32 %v109, %v108
    %v111 = vadd.f32 %v100, %v110
    %s112 = sld [smem:[#allocation2 + $0x8]]
    %s113 = sld [smem:[#allocation2 + $0x28]]
    %s114 = sld [smem:[#allocation2 + $0x48]]
    %v115 = vstv %s112
    %v116 = vmul.f32 %v23, %v115
    %v117 = vstv %s113
    %v118 = vadd.f32 %v116, %v117
    %v119 = vmax.f32 %v118, 0.0
    %v120 = vstv %s114
    %v121 = vmul.f32 %v120, %v119
    %v122 = vadd.f32 %v111, %v121
    %s123 = sld [smem:[#allocation2 + $0x9]]
    %s124 = sld [smem:[#allocation2 + $0x29]]
    %s125 = sld [smem:[#allocation2 + $0x49]]
    %v126 = vstv %s123
    %v127 = vmul.f32 %v23, %v126
    %v128 = vstv %s124
    %v129 = vadd.f32 %v127, %v128
    %v130 = vmax.f32 %v129, 0.0
    %v131 = vstv %s125
    %v132 = vmul.f32 %v131, %v130
    %v133 = vadd.f32 %v122, %v132
    %s134 = sld [smem:[#allocation2 + $0xa]]
    %s135 = sld [smem:[#allocation2 + $0x2a]]
    %s136 = sld [smem:[#allocation2 + $0x4a]]
    %v137 = vstv %s134
    %v138 = vmul.f32 %v23, %v137
    %v139 = vstv %s135
    %v140 = vadd.f32 %v138, %v139
    %v141 = vmax.f32 %v140, 0.0
    %v142 = vstv %s136
    %v143 = vmul.f32 %v142, %v141
    %v144 = vadd.f32 %v133, %v143
    %s145 = sld [smem:[#allocation2 + $0xb]]
    %s146 = sld [smem:[#allocation2 + $0x2b]]
    %s147 = sld [smem:[#allocation2 + $0x4b]]
    %v148 = vstv %s145
    %v149 = vmul.f32 %v23, %v148
    %v150 = vstv %s146
    %v151 = vadd.f32 %v149, %v150
    %v152 = vmax.f32 %v151, 0.0
    %v153 = vstv %s147
    %v154 = vmul.f32 %v153, %v152
    %v155 = vadd.f32 %v144, %v154
    %s156 = sld [smem:[#allocation2 + $0xc]]
    %s157 = sld [smem:[#allocation2 + $0x2c]]
    %s158 = sld [smem:[#allocation2 + $0x4c]]
    %v159 = vstv %s156
    %v160 = vmul.f32 %v23, %v159
    %v161 = vstv %s157
    %v162 = vadd.f32 %v160, %v161
    %v163 = vmax.f32 %v162, 0.0
    %v164 = vstv %s158
    %v165 = vmul.f32 %v164, %v163
    %v166 = vadd.f32 %v155, %v165
    %s167 = sld [smem:[#allocation2 + $0xd]]
    %s168 = sld [smem:[#allocation2 + $0x2d]]
    %s169 = sld [smem:[#allocation2 + $0x4d]]
    %v170 = vstv %s167
    %v171 = vmul.f32 %v23, %v170
    %v172 = vstv %s168
    %v173 = vadd.f32 %v171, %v172
    %v174 = vmax.f32 %v173, 0.0
    %v175 = vstv %s169
    %v176 = vmul.f32 %v175, %v174
    %v177 = vadd.f32 %v166, %v176
    %s178 = sld [smem:[#allocation2 + $0xe]]
    %s179 = sld [smem:[#allocation2 + $0x2e]]
    %s180 = sld [smem:[#allocation2 + $0x4e]]
    %v181 = vstv %s178
    %v182 = vmul.f32 %v23, %v181
    %v183 = vstv %s179
    %v184 = vadd.f32 %v182, %v183
    %v185 = vmax.f32 %v184, 0.0
    %v186 = vstv %s180
    %v187 = vmul.f32 %v186, %v185
    %v188 = vadd.f32 %v177, %v187
    %s189 = sld [smem:[#allocation2 + $0xf]]
    %s190 = sld [smem:[#allocation2 + $0x2f]]
    %s191 = sld [smem:[#allocation2 + $0x4f]]
    %v192 = vstv %s189
    %v193 = vmul.f32 %v23, %v192
    %v194 = vstv %s190
    %v195 = vadd.f32 %v193, %v194
    %v196 = vmax.f32 %v195, 0.0
    %v197 = vstv %s191
    %v198 = vmul.f32 %v197, %v196
    %v199 = vadd.f32 %v188, %v198
    %s200 = sld [smem:[#allocation2 + $0x10]]
    %s201 = sld [smem:[#allocation2 + $0x30]]
    %s202 = sld [smem:[#allocation2 + $0x50]]
    %v203 = vstv %s200
    %v204 = vmul.f32 %v23, %v203
    %v205 = vstv %s201
    %v206 = vadd.f32 %v204, %v205
    %v207 = vmax.f32 %v206, 0.0
    %v208 = vstv %s202
    %v209 = vmul.f32 %v208, %v207
    %v210 = vadd.f32 %v199, %v209
    %s211 = sld [smem:[#allocation2 + $0x11]]
    %s212 = sld [smem:[#allocation2 + $0x31]]
    %s213 = sld [smem:[#allocation2 + $0x51]]
    %v214 = vstv %s211
    %v215 = vmul.f32 %v23, %v214
    %v216 = vstv %s212
    %v217 = vadd.f32 %v215, %v216
    %v218 = vmax.f32 %v217, 0.0
    %v219 = vstv %s213
    %v220 = vmul.f32 %v219, %v218
    %v221 = vadd.f32 %v210, %v220
    %s222 = sld [smem:[#allocation2 + $0x12]]
    %s223 = sld [smem:[#allocation2 + $0x32]]
    %s224 = sld [smem:[#allocation2 + $0x52]]
    %v225 = vstv %s222
    %v226 = vmul.f32 %v23, %v225
    %v227 = vstv %s223
    %v228 = vadd.f32 %v226, %v227
    %v229 = vmax.f32 %v228, 0.0
    %v230 = vstv %s224
    %v231 = vmul.f32 %v230, %v229
    %v232 = vadd.f32 %v221, %v231
    %s233 = sld [smem:[#allocation2 + $0x13]]
    %s234 = sld [smem:[#allocation2 + $0x33]]
    %s235 = sld [smem:[#allocation2 + $0x53]]
    %v236 = vstv %s233
    %v237 = vmul.f32 %v23, %v236
    %v238 = vstv %s234
    %v239 = vadd.f32 %v237, %v238
    %v240 = vmax.f32 %v239, 0.0
    %v241 = vstv %s235
    %v242 = vmul.f32 %v241, %v240
    %v243 = vadd.f32 %v232, %v242
    %s244 = sld [smem:[#allocation2 + $0x14]]
    %s245 = sld [smem:[#allocation2 + $0x34]]
    %s246 = sld [smem:[#allocation2 + $0x54]]
    %v247 = vstv %s244
    %v248 = vmul.f32 %v23, %v247
    %v249 = vstv %s245
    %v250 = vadd.f32 %v248, %v249
    %v251 = vmax.f32 %v250, 0.0
    %v252 = vstv %s246
    %v253 = vmul.f32 %v252, %v251
    %v254 = vadd.f32 %v243, %v253
    %s255 = sld [smem:[#allocation2 + $0x15]]
    %s256 = sld [smem:[#allocation2 + $0x35]]
    %s257 = sld [smem:[#allocation2 + $0x55]]
    %v258 = vstv %s255
    %v259 = vmul.f32 %v23, %v258
    %v260 = vstv %s256
    %v261 = vadd.f32 %v259, %v260
    %v262 = vmax.f32 %v261, 0.0
    %v263 = vstv %s257
    %v264 = vmul.f32 %v263, %v262
    %v265 = vadd.f32 %v254, %v264
    %s266 = sld [smem:[#allocation2 + $0x16]]
    %s267 = sld [smem:[#allocation2 + $0x36]]
    %s268 = sld [smem:[#allocation2 + $0x56]]
    %v269 = vstv %s266
    %v270 = vmul.f32 %v23, %v269
    %v271 = vstv %s267
    %v272 = vadd.f32 %v270, %v271
    %v273 = vmax.f32 %v272, 0.0
    %v274 = vstv %s268
    %v275 = vmul.f32 %v274, %v273
    %v276 = vadd.f32 %v265, %v275
    %s277 = sld [smem:[#allocation2 + $0x17]]
    %s278 = sld [smem:[#allocation2 + $0x37]]
    %s279 = sld [smem:[#allocation2 + $0x57]]
    %v280 = vstv %s277
    %v281 = vmul.f32 %v23, %v280
    %v282 = vstv %s278
    %v283 = vadd.f32 %v281, %v282
    %v284 = vmax.f32 %v283, 0.0
    %v285 = vstv %s279
    %v286 = vmul.f32 %v285, %v284
    %v287 = vadd.f32 %v276, %v286
    %s288 = sld [smem:[#allocation2 + $0x18]]
    %s289 = sld [smem:[#allocation2 + $0x38]]
    %s290 = sld [smem:[#allocation2 + $0x58]]
    %v291 = vstv %s288
    %v292 = vmul.f32 %v23, %v291
    %v293 = vstv %s289
    %v294 = vadd.f32 %v292, %v293
    %v295 = vmax.f32 %v294, 0.0
    %v296 = vstv %s290
    %v297 = vmul.f32 %v296, %v295
    %v298 = vadd.f32 %v287, %v297
    %s299 = sld [smem:[#allocation2 + $0x19]]
    %s300 = sld [smem:[#allocation2 + $0x39]]
    %s301 = sld [smem:[#allocation2 + $0x59]]
    %v302 = vstv %s299
    %v303 = vmul.f32 %v23, %v302
    %v304 = vstv %s300
    %v305 = vadd.f32 %v303, %v304
    %v306 = vmax.f32 %v305, 0.0
    %v307 = vstv %s301
    %v308 = vmul.f32 %v307, %v306
    %v309 = vadd.f32 %v298, %v308
    %s310 = sld [smem:[#allocation2 + $0x1a]]
    %s311 = sld [smem:[#allocation2 + $0x3a]]
    %s312 = sld [smem:[#allocation2 + $0x5a]]
    %v313 = vstv %s310
    %v314 = vmul.f32 %v23, %v313
    %v315 = vstv %s311
    %v316 = vadd.f32 %v314, %v315
    %v317 = vmax.f32 %v316, 0.0
    %v318 = vstv %s312
    %v319 = vmul.f32 %v318, %v317
    %v320 = vadd.f32 %v309, %v319
    %s321 = sld [smem:[#allocation2 + $0x1b]]
    %s322 = sld [smem:[#allocation2 + $0x3b]]
    %s323 = sld [smem:[#allocation2 + $0x5b]]
    %v324 = vstv %s321
    %v325 = vmul.f32 %v23, %v324
    %v326 = vstv %s322
    %v327 = vadd.f32 %v325, %v326
    %v328 = vmax.f32 %v327, 0.0
    %v329 = vstv %s323
    %v330 = vmul.f32 %v329, %v328
    %v331 = vadd.f32 %v320, %v330
    %s332 = sld [smem:[#allocation2 + $0x1c]]
    %s333 = sld [smem:[#allocation2 + $0x3c]]
    %s334 = sld [smem:[#allocation2 + $0x5c]]
    %v335 = vstv %s332
    %v336 = vmul.f32 %v23, %v335
    %v337 = vstv %s333
    %v338 = vadd.f32 %v336, %v337
    %v339 = vmax.f32 %v338, 0.0
    %v340 = vstv %s334
    %v341 = vmul.f32 %v340, %v339
    %v342 = vadd.f32 %v331, %v341
    %s343 = sld [smem:[#allocation2 + $0x1d]]
    %s344 = sld [smem:[#allocation2 + $0x3d]]
    %s345 = sld [smem:[#allocation2 + $0x5d]]
    %v346 = vstv %s343
    %v347 = vmul.f32 %v23, %v346
    %v348 = vstv %s344
    %v349 = vadd.f32 %v347, %v348
    %v350 = vmax.f32 %v349, 0.0
    %v351 = vstv %s345
    %v352 = vmul.f32 %v351, %v350
    %v353 = vadd.f32 %v342, %v352
    %s354 = sld [smem:[#allocation2 + $0x1e]]
    %s355 = sld [smem:[#allocation2 + $0x3e]]
    %s356 = sld [smem:[#allocation2 + $0x5e]]
    %v357 = vstv %s354
    %v358 = vmul.f32 %v23, %v357
    %v359 = vstv %s355
    %v360 = vadd.f32 %v358, %v359
    %v361 = vmax.f32 %v360, 0.0
    %v362 = vstv %s356
    %v363 = vmul.f32 %v362, %v361
    %v364 = vadd.f32 %v353, %v363
    %s365 = sld [smem:[#allocation2 + $0x1f]]
    %s366 = sld [smem:[#allocation2 + $0x3f]]
    %s367 = sld [smem:[#allocation2 + $0x5f]]
    %v368 = vstv %s365
    %v369 = vmul.f32 %v23, %v368
    %v370 = vstv %s366
    %v371 = vadd.f32 %v369, %v370
    %v372 = vmax.f32 %v371, 0.0
    %v373 = vstv %s367
    %v374 = vmul.f32 %v373, %v372
    %v375 = vadd.f32 %v364, %v374
    %s376 = sld [smem:[#allocation2 + $0x60]]
    %v377 = vstv %s376
    %v378 = vadd.f32 %v375, %v377
    %379 = vst [vmem:[#allocation5] sm:$0x1] %v378
    // Predicated region
    $region14: #{tpu_custom_call.1} parent=1 // pred_check
      _
    $region15: #{tpu_custom_call.1} parent=1 // pred_check_branch
      %381 = sbr.rel (0) target = $region17
    $region16: #{tpu_custom_call.1} parent=1 // pred_region
      %s383 = ssub.s32 16, 16
      %384 = vsyncadd [#allocation3], %s383
      %s386 = sshll.u32 [#allocation5], 4
      %s387 = int_to_ptr.vmem [resolvable:$true] %s386
      %389 = dma.vmem_to_hbm [thread:$0]  %s387, 16, %s2, [#allocation3]
    $region17: #{tpu_custom_call.1} parent=1 // pred_fallthru
      _
    // Predicated region
    $region18: #{tpu_custom_call.1} parent=1 // pred_check
      _
    $region19: #{tpu_custom_call.1} parent=1 // pred_check_branch
      %391 = sbr.rel (0) target = $region21
    $region20: #{tpu_custom_call.1} parent=1 // pred_region
      %392 = dma.done [#allocation3], 16
    $region21: #{tpu_custom_call.1} parent=1 // pred_fallthru
      _
    %393 = vsyncpa [#allocation3], 1
    %394 = vsyncpa [#allocation4], 1

</llo_original>
